<compile_context>
chip_gen: v5e
topology: v5e:2x2
jax: 0.10.0
libtpu: 0.0.40
codegen_flags: <defaults>
</compile_context>

<pallas_src>
import numpy as np
import jax
import jax.numpy as jnp
from jax import lax
from jax.experimental import pallas as pl
from jax.experimental.pallas import tpu as pltpu

EPS = 1e-11
_TWO_PI = float(2.0 * np.pi)


def _round_up(a, b):
    return -(-a // b) * b


def _wrap_phase(ph):
    # wrap into [-pi, pi) so f32 cos/sin (and bf16 tables) stay accurate
    return ph - _TWO_PI * jnp.floor(ph * (1.0 / _TWO_PI) + 0.5)


def _choose_g_tiling(W, target=512):
    """G slab = tr rows of the (D*H, W) view; tg = tr*W is a multiple of 128."""
    g = int(np.gcd(W, 128))
    tr0 = 128 // g
    tg0 = tr0 * W                       # minimal slab: multiple of 128 and of W
    k = max(1, target // tg0)
    tr = tr0 * k
    tg = tr * W
    tc = tg0                            # in-kernel chunk width (lanes)
    while tc > 256 and tc % 2 == 0 and (tc // 2) % 128 == 0:
        tc //= 2
    return tr, tg, tc


# ---------------------------------------------------------------------------
# normalize_instance statistics: single tiled sum / sum-of-squares pass.
# The (x - mean) * inv apply is fused into the volume preparation (no 2nd pass).
# ---------------------------------------------------------------------------
def _sum_sq_kernel(x_ref, o_ref):
    @pl.when(pl.program_id(0) == 0)
    def _():
        o_ref[...] = jnp.zeros_like(o_ref)
    x = x_ref[...]
    s = jnp.sum(x, axis=0, keepdims=True)
    ss = jnp.sum(x * x, axis=0, keepdims=True)
    o_ref[...] += jnp.concatenate([s, ss], axis=0)


def instance_stats(x):
    """Whole-tensor mean and 1/(std+eps) (torch-style unbiased std)."""
    n = int(np.prod(x.shape))
    cols = 128
    rows = -(-n // cols)
    flat = x.reshape(-1).astype(jnp.float32)
    if rows * cols != n:                 # zero padding leaves sum/sumsq exact
        flat = jnp.pad(flat, (0, rows * cols - n))
    if rows <= 1024:
        tr, rows_p = rows, rows
    else:
        tr = 1024
        rows_p = int(_round_up(rows, tr))
        if rows_p != rows:
            flat = jnp.pad(flat, (0, (rows_p - rows) * cols))
    x2 = flat.reshape(rows_p, cols)

    stats = pl.pallas_call(
        _sum_sq_kernel,
        out_shape=jax.ShapeDtypeStruct((2, cols), jnp.float32),
        grid=(rows_p // tr,),
        in_specs=[pl.BlockSpec((tr, cols), lambda i: (i, 0))],
        out_specs=pl.BlockSpec((2, cols), lambda i: (0, 0)),
        compiler_params=pltpu.CompilerParams(dimension_semantics=("arbitrary",)),
    )(x2)

    s = jnp.sum(stats[0])
    ss = jnp.sum(stats[1])
    mean = s / n
    var = (ss - n * mean * mean) / (n - 1)      # unbiased, like torch .std()
    # TODO(synk): E[x^2]-mean^2 can cancel for large-mean data (clamped to 0).
    inv = 1.0 / (jnp.sqrt(jnp.maximum(var, 0.0)) + EPS)
    return mean, inv


# ---------------------------------------------------------------------------
# fused k-space sampling:  ksp[b2, m] = sum_g vol[b2, g] * A[m, g]
# Separable trilinear weights: wx (W, tm), wyz (tr, tm) sub-tables broadcast to
# each (tc, tm) slab chunk with 0/1 placement matmuls (MXU), then one multiply.
# ---------------------------------------------------------------------------
def _make_sample_kernel(dims_xyz, tg, tc, tr):
    W, H, D = dims_xyz
    n_chunks = tg // tc

    def kernel(coordt_ref, pt_ref, qt_ref, vol_ref, ksp_ref):
        j = pl.program_id(1)                       # G-slab index (reduction)

        @pl.when(j == 0)
        def _():
            ksp_ref[...] = jnp.zeros_like(ksp_ref)

        coordt = coordt_ref[...]                   # (3, tm) f32 rows = (x,y,z)
        # per-dimension tent-weight tables (f32 math, bf16 tables)
        xg = lax.broadcasted_iota(jnp.int32, (W, 1), 0).astype(jnp.float32)
        wx = jnp.maximum(0.0, 1.0 - jnp.abs(xg - (coordt[0:1, :] + W * 0.5)))
        r0 = (j * tr).astype(jnp.float32)
        rloc = lax.broadcasted_iota(jnp.int32, (tr, 1), 0).astype(jnp.float32) + r0
        zg = jnp.floor((rloc + 0.5) / float(H))    # z = row // H (safe floor)
        yg = rloc - zg * float(H)                  # y = row %  H
        wy = jnp.maximum(0.0, 1.0 - jnp.abs(yg - (coordt[1:2, :] + H * 0.5)))
        wz = jnp.maximum(0.0, 1.0 - jnp.abs(zg - (coordt[2:3, :] + D * 0.5)))
        wx = wx.astype(jnp.bfloat16)               # (W, tm)
        wyz = (wy * wz).astype(jnp.bfloat16)       # (tr, tm)

        for c in range(n_chunks):                  # static, small unroll
            c0 = c * tc
            # broadcast small tables to the (tc, tm) chunk on the (idle) MXU
            wxf = jnp.dot(pt_ref[c0:c0 + tc, :], wx,
                          preferred_element_type=jnp.float32)
            wyzf = jnp.dot(qt_ref[c0:c0 + tc, :], wyz,
                           preferred_element_type=jnp.float32)
            a_t = (wxf * wyzf).astype(jnp.bfloat16)            # (tc, tm)
            v = vol_ref[:, c0:c0 + tc]                          # (B2, tc)
            ksp_ref[...] += jnp.dot(v, a_t, preferred_element_type=jnp.float32)

    return kernel


# ---------------------------------------------------------------------------
# fused adjoint NUDFT:  real = kr@C - ki@S ; imag = kr@S + ki@C
# Separable phase: cos/sin only on (tm, W) and (tm, tr) sub-tables, combined per
# chunk via trig identities (bf16) after MXU placement broadcasts; K = [kr; ki]
# is stacked so only 2 main dots per chunk are needed.
# ---------------------------------------------------------------------------
def _make_adjoint_kernel(dims_xyz, batch, tg, tc, tr):
    W, H, D = dims_xyz
    n_chunks = tg // tc
    B = batch

    def kernel(coord_ref, p_ref, q_ref, k_ref, or_ref, oi_ref):
        j = pl.program_id(0)                       # G-slab (parallel, resident)
        i = pl.program_id(1)                       # M-tile (reduction)

        @pl.when(i == 0)
        def _():
            or_ref[...] = jnp.zeros_like(or_ref)
            oi_ref[...] = jnp.zeros_like(oi_ref)

        coord = coord_ref[...]                     # (tm, 3) f32
        kx = coord[:, 0:1]
        ky = coord[:, 1:2]
        kz = coord[:, 2:3]

        # per-dimension phase tables (f32, wrapped), then bf16 cos/sin
        xg = lax.broadcasted_iota(jnp.int32, (1, W), 1).astype(jnp.float32) - W * 0.5
        ph_x = _wrap_phase((_TWO_PI / W) * (kx * xg))                  # (tm, W)
        r0 = (j * tr).astype(jnp.float32)
        rloc = lax.broadcasted_iota(jnp.int32, (1, tr), 1).astype(jnp.float32) + r0
        zg = jnp.floor((rloc + 0.5) / float(H))
        yg = rloc - zg * float(H)
        ph_yz = _wrap_phase((_TWO_PI / H) * (ky * (yg - H * 0.5))
                            + (_TWO_PI / D) * (kz * (zg - D * 0.5)))   # (tm, tr)

        cx = jnp.cos(ph_x).astype(jnp.bfloat16)
        sx = jnp.sin(ph_x).astype(jnp.bfloat16)
        cyz = jnp.cos(ph_yz).astype(jnp.bfloat16)
        syz = jnp.sin(ph_yz).astype(jnp.bfloat16)

        kst = k_ref[...]                           # (2B, tm) bf16, rows [kr; ki]

        for c in range(n_chunks):                  # static, small unroll
            c0 = c * tc
            pc = p_ref[:, c0:c0 + tc]              # (W, tc)
            qc = q_ref[:, c0:c0 + tc]              # (tr, tc)
            cyzf = jnp.dot(cyz, qc, preferred_element_type=jnp.float32).astype(jnp.bfloat16)
            cxf = jnp.dot(cx, pc, preferred_element_type=jnp.float32).astype(jnp.bfloat16)
            syzf = jnp.dot(syz, qc, preferred_element_type=jnp.float32).astype(jnp.bfloat16)
            sxf = jnp.dot(sx, pc, preferred_element_type=jnp.float32).astype(jnp.bfloat16)
            cc = cyzf * cxf - syzf * sxf           # cos(ph_x + ph_yz)  (tm, tc)
            ss = cyzf * sxf + syzf * cxf           # sin(ph_x + ph_yz)
            pr = jnp.dot(kst, cc, preferred_element_type=jnp.float32)  # (2B, tc)
            ps = jnp.dot(kst, ss, preferred_element_type=jnp.float32)
            or_ref[:, c0:c0 + tc] += pr[:B, :] - ps[B:, :]
            oi_ref[:, c0:c0 + tc] += ps[:B, :] + pr[B:, :]

    return kernel


# ---------------------------------------------------------------------------
# Subsampling layer / model (glue around the kernels)
# ---------------------------------------------------------------------------
class SubsamplingLayer3D:
    def __init__(self, acceleration_factor, res, depth, trajectory_learning,
                 initialization, points_per_shot, tm=128, tg_target=512):
        assert initialization == 'sticks', "only the deterministic 'sticks' init is built in"
        # TODO(synk): radial/2dradial/stackofstars inits need external .mat/.npy files.
        self.res = res
        self.depth = depth
        self.points_per_shot = points_per_shot
        self.tm = tm
        self.tg_target = tg_target
        num_shots = res * depth // acceleration_factor
        num_shots = int(np.sqrt(num_shots))
        x = np.zeros((num_shots ** 2, points_per_shot, 3), dtype=np.float64)
        r = np.linspace(-1, 1, points_per_shot)
        theta = np.linspace(0, np.pi, num_shots)
        phi = np.linspace(0, np.pi, num_shots)
        i = 0
        for lgn in theta:
            for lat in phi:
                x[i, :, 0] = r * np.sin(lgn) * np.cos(lat) * res / 2
                x[i, :, 1] = r * np.sin(lgn) * np.sin(lat) * res / 2
                x[i, :, 2] = r * np.cos(lgn) * depth / 2
                i += 1
        self.x = jnp.asarray(x, dtype=jnp.float32)            # trajectory "parameter"
        self.orig_trajectory = jnp.asarray(x, dtype=jnp.float32)

    def __call__(self, inp, mean=None, inv_std=None):
        # inp: (B, 1, 1, D, H, W, 2)
        inp = jnp.squeeze(jnp.squeeze(inp, axis=1), axis=1)   # (B, D, H, W, 2)
        B, D, H, W, _ = inp.shape
        x = self.x.reshape(-1, 3)
        x = jnp.clip(x, -self.res / 2, self.res / 2)
        # masked_scatter(x != x, orig_trajectory): replaces NaN entries
        x = jnp.where(jnp.isnan(x), self.orig_trajectory.reshape(-1, 3), x)

        M = x.shape[0]
        G = D * H * W
        R = D * H
        dims_xyz = (W, H, D)
        tm = self.tm
        tr, tg, tc = _choose_g_tiling(W, self.tg_target)
        Mp = int(_round_up(M, tm))
        Rp = int(_round_up(R, tr))
        Gp = Rp * W
        B2 = 2 * B

        # trajectory padded with an off-grid sentinel: padded rows get zero tent
        # weight everywhere -> ksp == 0 there -> no masking pass is needed.
        sentinel = -3.0 * float(max(W, H, D))
        coord = jnp.pad(x.astype(jnp.float32), ((0, Mp - M), (0, 0)),
                        constant_values=sentinel)                       # (Mp, 3)
        coord_t = coord.T                                               # (3, Mp)

        # 0/1 placement matrices mapping per-dim tables onto the flattened slab
        lanes = np.arange(tg)
        p_np = (lanes[None, :] % W == np.arange(W)[:, None]).astype(np.float32)
        q_np = (lanes[None, :] // W == np.arange(tr)[:, None]).astype(np.float32)
        P = jnp.asarray(p_np, dtype=jnp.bfloat16)               # (W, tg)  adjoint
        Q = jnp.asarray(q_np, dtype=jnp.bfloat16)               # (tr, tg) adjoint
        Pt = jnp.asarray(np.ascontiguousarray(p_np.T), dtype=jnp.bfloat16)  # (tg, W)
        Qt = jnp.asarray(np.ascontiguousarray(q_np.T), dtype=jnp.bfloat16)  # (tg, tr)

        # volume as (B*2, Gp) bf16 (row b2 = b*2 + {0: real, 1: imag}); the
        # normalize_instance apply is fused into this single preparation pass.
        vol = jnp.transpose(inp.reshape(B, G, 2), (0, 2, 1)).reshape(B2, G)
        if mean is not None:
            vol = (vol - mean) * inv_std
        vol = jnp.pad(vol, ((0, 0), (0, Gp - G))).astype(jnp.bfloat16)

        # ---- fused k-space sampling (reduce over G, output resident over M) ----
        # NOTE: with M == tm the parallel axis has a single step (fine for the
        # small test; production M >> tm gives >=2 steps for v7x megacore).
        ksp = pl.pallas_call(
            _make_sample_kernel(dims_xyz, tg, tc, tr),
            out_shape=jax.ShapeDtypeStruct((B2, Mp), jnp.float32),
            grid=(Mp // tm, Gp // tg),
            in_specs=[pl.BlockSpec((3, tm), lambda i, j: (0, i)),
                      pl.BlockSpec((tg, W), lambda i, j: (0, 0)),
                      pl.BlockSpec((tg, tr), lambda i, j: (0, 0)),
                      pl.BlockSpec((B2, tg), lambda i, j: (0, j))],
            out_specs=pl.BlockSpec((B2, tm), lambda i, j: (0, i)),
            compiler_params=pltpu.CompilerParams(
                dimension_semantics=("parallel", "arbitrary")),
        )(coord_t, Pt, Qt, vol)

        # stacked K = [kr; ki]  (2B, Mp) bf16 (padded m columns are exactly 0)
        ksp3 = ksp.reshape(B, 2, Mp)
        kst = jnp.concatenate([ksp3[:, 0, :], ksp3[:, 1, :]],
                              axis=0).astype(jnp.bfloat16)

        # ---- fused adjoint NUDFT (reduce over M, outputs resident over G slabs) ----
        out_r, out_i = pl.pallas_call(
            _make_adjoint_kernel(dims_xyz, B, tg, tc, tr),
            out_shape=(jax.ShapeDtypeStruct((B, Gp), jnp.float32),
                       jax.ShapeDtypeStruct((B, Gp), jnp.float32)),
            grid=(Gp // tg, Mp // tm),
            in_specs=[pl.BlockSpec((tm, 3), lambda j, i: (i, 0)),
                      pl.BlockSpec((W, tg), lambda j, i: (0, 0)),
                      pl.BlockSpec((tr, tg), lambda j, i: (0, 0)),
                      pl.BlockSpec((2 * B, tm), lambda j, i: (0, i))],
            out_specs=(pl.BlockSpec((B, tg), lambda j, i: (0, j)),
                       pl.BlockSpec((B, tg), lambda j, i: (0, j))),
            compiler_params=pltpu.CompilerParams(
                dimension_semantics=("parallel", "arbitrary")),
        )(coord, P, Q, kst)

        real = out_r[:, :G].reshape(B, D, H, W)
        imag = out_i[:, :G].reshape(B, D, H, W)
        img = jnp.stack([real, imag], axis=-1)                # (B, D, H, W, 2)
        return img[:, None]                                   # unsqueeze(1)


class SubsamplingModel3D:
    def __init__(self, in_chans, out_chans, f_maps, acceleration_factor, res, depth,
                 trajectory_learning, initialization, points_per_shot):
        self.subsampling = SubsamplingLayer3D(acceleration_factor, res, depth,
                                              trajectory_learning, initialization,
                                              points_per_shot)
        # TODO(synk): UNet3D(in_chans, out_chans, f_maps) is external (pytorch-3dunet)
        # and not provided; reconstruction step omitted (forward returns subsampled vol).
        self.in_chans, self.out_chans, self.f_maps = in_chans, out_chans, f_maps

    def __call__(self, inp):
        mean, inv = instance_stats(inp)           # normalize_instance(eps=1e-11)
        return self.subsampling(inp, mean, inv)   # apply fused into vol prep

    def get_corrupted(self, inp):
        return self.subsampling(inp)


if __name__ == "__main__":
    B, D, H, W = 2, 8, 16, 16
    key = jax.random.PRNGKey(0)
    x = jax.random.normal(key, (B, 1, 1, D, H, W, 2), dtype=jnp.float32)

    model = SubsamplingModel3D(in_chans=2, out_chans=2, f_maps=8,
                               acceleration_factor=8, res=W, depth=D,
                               trajectory_learning=False, initialization='sticks',
                               points_per_shot=8)
    out = model(x)
    out = jax.block_until_ready(out)
    assert out.shape == (B, 1, D, H, W, 2), out.shape
    assert bool(jnp.all(jnp.isfinite(out)))
    print("KERNEL_OK")
</pallas_src>

<mosaic_0001>
module attributes {stable_mosaic.version = 11 : i64} {
  func.func @_sum_sq_kernel(%arg0: i32, %arg1: memref<64x128xf32, #tpu.memory_space<vmem>>, %arg2: memref<2x128xf32, #tpu.memory_space<vmem>>) attributes {dimension_semantics = [#tpu.dimension_semantics<arbitrary>], iteration_bounds = array<i64: 1>, scalar_prefetch = 0 : i64, scratch_operands = 0 : i64, tpu.core_type = #tpu.core_type<tc>, window_params = [{transform_indices = @transform_0, window_bounds = array<i64: 64, 128>}, {pipeline_mode = #tpu.pipeline_mode<synchronous>, transform_indices = @transform_1, window_bounds = array<i64: 2, 128>}]} {
    %c0_i32 = arith.constant 0 : i32
    %0 = arith.cmpi eq, %arg0, %c0_i32 : i32
    %1 = arith.extui %0 : i1 to i32
    %c0_i32_0 = arith.constant 0 : i32
    %2 = arith.cmpi ne, %1, %c0_i32_0 : i32
    scf.if %2 {
      %cst_7 = arith.constant 0.000000e+00 : f32
      %13 = vector.broadcast %cst_7 : f32 to vector<2x128xf32>
      %c0_8 = arith.constant 0 : index
      %c0_9 = arith.constant 0 : index
      %14 = vector.load %arg2[%c0_8, %c0_9] : memref<2x128xf32, #tpu.memory_space<vmem>>, vector<2x128xf32>
      tpu.vector_store %arg2[%c0_8, %c0_9], %13 {strides = array<i32>} : memref<2x128xf32, #tpu.memory_space<vmem>>, vector<2x128xf32>,
    } else {
    }
    %c0 = arith.constant 0 : index
    %c0_1 = arith.constant 0 : index
    %3 = vector.load %arg1[%c0, %c0_1] : memref<64x128xf32, #tpu.memory_space<vmem>>, vector<64x128xf32>
    %cst = arith.constant dense<0.000000e+00> : vector<128xf32>
    %4 = vector.multi_reduction <add>, %3, %cst [0] : vector<64x128xf32> to vector<128xf32>
    %5 = vector.shape_cast %4 : vector<128xf32> to vector<1x128xf32>
    %6 = arith.mulf %3, %3 : vector<64x128xf32>
    %cst_2 = arith.constant dense<0.000000e+00> : vector<128xf32>
    %7 = vector.multi_reduction <add>, %6, %cst_2 [0] : vector<64x128xf32> to vector<128xf32>
    %8 = vector.shape_cast %7 : vector<128xf32> to vector<1x128xf32>
    %c0_3 = arith.constant 0 : index
    %c0_4 = arith.constant 0 : index
    %9 = vector.load %arg2[%c0_3, %c0_4] : memref<2x128xf32, #tpu.memory_space<vmem>>, vector<2x128xf32>
    %10 = tpu.concatenate %5, %8 in 0 : vector<1x128xf32>, vector<1x128xf32> -> vector<2x128xf32>
    %11 = arith.addf %9, %10 : vector<2x128xf32>
    %c0_5 = arith.constant 0 : index
    %c0_6 = arith.constant 0 : index
    %12 = vector.load %arg2[%c0_5, %c0_6] : memref<2x128xf32, #tpu.memory_space<vmem>>, vector<2x128xf32>
    tpu.vector_store %arg2[%c0_5, %c0_6], %11 {strides = array<i32>} : memref<2x128xf32, #tpu.memory_space<vmem>>, vector<2x128xf32>,
    return
  }
  func.func @transform_0(%arg0: i32) -> (i32, i32) {
    %c0_i32 = arith.constant 0 : i32
    %c0_i32_0 = arith.constant 0 : i32
    return %arg0, %c0_i32 : i32, i32
  }
  func.func @transform_1(%arg0: i32) -> (i32, i32) {
    %c0_i32 = arith.constant 0 : i32
    %c0_i32_0 = arith.constant 0 : i32
    %c0_i32_1 = arith.constant 0 : i32
    return %c0_i32, %c0_i32_0 : i32, i32
  }
}

</mosaic_0001>

<llo_original>
// kernel: tpu_custom_call.1
$region0: #{tpu_custom_call.1}
  #allocation0 [shape = 'u32[]', space=smem, size = 0x4, offset = 0x4, fixed_abs, tag = 'smem constant byte address 0x4 - core index']
  #allocation1 [shape = 'u32[72,128]{1,0:T(1,128)}', space=vmem, size = 0x9000, scoped, tag = 'internal scratch']
  %s0 = inlined_call_operand.hbm [shape: f32[64,128], index: 0, kind: input, shape index: {}]
  %s1 = inlined_call_operand.hbm [shape: f32[2,128], index: 1, kind: output, shape index: {}]
  %s2 = sld [smem:[#allocation0]]
  $region22: #{tpu_custom_call.1} parent=0
    _
  %s4 = ssub.s32 1, %s2
  %s5 = scalar_select 0, %s4, %s2
  $region1: #{tpu_custom_call.1} parent=0
    #allocation2 [shape = 'u8[32768]{0}', space=vmem, size = 0x8000, scoped, tag = 'input window, operand 0, single buffered']
    #allocation3 [shape = 's32[1]{0}', space=sflag, size = 0x4, scoped, tag = 'scoped memory for tpu_custom_call.1']
    #allocation4 [shape = 's32[1]{0}', space=sflag, size = 0x4, scoped, tag = 'scoped memory for tpu_custom_call.1']
    #allocation5 [shape = 'u8[1024]{0}', space=vmem, size = 0x400, scoped, tag = 'output window, operand 0, single buffered']
    %6 = vsyncpa [#allocation3], 0
    %7 = vsyncpa [#allocation4], 0
    // Predicated region
    $region2: #{tpu_custom_call.1} parent=1 // pred_check
      _
    $region3: #{tpu_custom_call.1} parent=1 // pred_check_branch
      %9 = sbr.rel (0) target = $region5
    $region4: #{tpu_custom_call.1} parent=1 // pred_region
      %11 = vsyncadd [#allocation3], 0
      %s12 = sshll.u32 %s0, 4
      %s13 = int_to_ptr.hbm [resolvable:$true] %s12
      %s14 = sshll.u32 [#allocation2], 4
      %s15 = int_to_ptr.vmem [resolvable:$true] %s14
      %20 = dma.hbm_to_vmem [thread:$0]  %s13, 1024, %s15, [#allocation3], 128, 128, 8
    $region5: #{tpu_custom_call.1} parent=1 // pred_fallthru
      _
    // Predicated region
    $region6: #{tpu_custom_call.1} parent=1 // pred_check
      _
    $region7: #{tpu_custom_call.1} parent=1 // pred_check_branch
      %22 = sbr.rel (0) target = $region9
    $region8: #{tpu_custom_call.1} parent=1 // pred_region
      %24 = dma.done [#allocation3], 1024
    $region9: #{tpu_custom_call.1} parent=1 // pred_fallthru
      _
    %p25 = scmp.eq.s32.totalorder 0, 0
    // Predicated region
    $region10: #{tpu_custom_call.1} parent=1 // pred_check
      %p26 = pneg %p25
    $region11: #{tpu_custom_call.1} parent=1 // pred_check_branch
      %28 = sbr.rel (%p26) target = $region13
    $region12: #{tpu_custom_call.1} parent=1 // pred_region
      %29 = vst [vmem:[#allocation5] sm:$0x3] 0.0
    $region13: #{tpu_custom_call.1} parent=1 // pred_fallthru
      _
    %v30 = vld [vmem:[#allocation2] sm:$0xff]
    %v31 = vld [vmem:[#allocation2 + $0x8] sm:$0xff]
    %v32 = vld [vmem:[#allocation2 + $0x10] sm:$0xff]
    %v33 = vld [vmem:[#allocation2 + $0x18] sm:$0xff]
    %v34 = vld [vmem:[#allocation2 + $0x20] sm:$0xff]
    %v35 = vld [vmem:[#allocation2 + $0x28] sm:$0xff]
    %v36 = vld [vmem:[#allocation2 + $0x30] sm:$0xff]
    %v37 = vld [vmem:[#allocation2 + $0x38] sm:$0xff]
    %v38 = vadd.f32 %v30, %v31
    %v39 = vadd.f32 %v38, %v32
    %v40 = vadd.f32 %v39, %v33
    %v41 = vadd.f32 %v40, %v34
    %v42 = vadd.f32 %v41, %v35
    %v43 = vadd.f32 %v42, %v36
    %v44 = vadd.f32 %v43, %v37
    %v45 = vrot.slane %v44, 4
    %v46 = vadd.f32 %v44, %v45
    %v47 = vrot.slane %v46, 2
    %v48 = vadd.f32 %v46, %v47
    %v49 = vrot.slane %v48, 1
    %v50 = vadd.f32 %v48, %v49
    %v51 = vmul.f32 %v30, %v30
    %v52 = vmul.f32 %v31, %v31
    %v53 = vmul.f32 %v32, %v32
    %v54 = vmul.f32 %v33, %v33
    %v55 = vmul.f32 %v34, %v34
    %v56 = vmul.f32 %v35, %v35
    %v57 = vmul.f32 %v36, %v36
    %v58 = vmul.f32 %v37, %v37
    %v59 = vadd.f32 %v51, %v52
    %v60 = vadd.f32 %v59, %v53
    %v61 = vadd.f32 %v60, %v54
    %v62 = vadd.f32 %v61, %v55
    %v63 = vadd.f32 %v62, %v56
    %v64 = vadd.f32 %v63, %v57
    %v65 = vadd.f32 %v64, %v58
    %v66 = vrot.slane %v65, 4
    %v67 = vadd.f32 %v65, %v66
    %v68 = vrot.slane %v67, 2
    %v69 = vadd.f32 %v67, %v68
    %v70 = vrot.slane %v69, 1
    %v71 = vadd.f32 %v69, %v70
    %v72 = vld [vmem:[#allocation5] sm:$0x3]
    %vm73 = vcmask 1040384
    %v74 = vsel %vm73, %v50, %v71
    %v75 = vadd.f32 %v72, %v74
    %76 = vst [vmem:[#allocation5] sm:$0x3] %v75
    // Predicated region
    $region14: #{tpu_custom_call.1} parent=1 // pred_check
      _
    $region15: #{tpu_custom_call.1} parent=1 // pred_check_branch
      %78 = sbr.rel (0) target = $region17
    $region16: #{tpu_custom_call.1} parent=1 // pred_region
      %80 = vsyncadd [#allocation4], 0
      %s82 = sshll.u32 [#allocation5], 4
      %s83 = int_to_ptr.vmem [resolvable:$true] %s82
      %s84 = sshll.u32 %s1, 4
      %s85 = int_to_ptr.hbm [resolvable:$true] %s84
      %87 = dma.vmem_to_hbm [thread:$0]  %s83, 32, %s85, [#allocation4]
    $region17: #{tpu_custom_call.1} parent=1 // pred_fallthru
      _
    // Predicated region
    $region18: #{tpu_custom_call.1} parent=1 // pred_check
      _
    $region19: #{tpu_custom_call.1} parent=1 // pred_check_branch
      %89 = sbr.rel (0) target = $region21
    $region20: #{tpu_custom_call.1} parent=1 // pred_region
      %91 = dma.done [#allocation4], 32
    $region21: #{tpu_custom_call.1} parent=1 // pred_fallthru
      _
    %92 = vsyncpa [#allocation3], 1
    %93 = vsyncpa [#allocation4], 1

</llo_original>
